<compile_context>
chip_gen: v5e
topology: v5e:2x2
jax: 0.10.0
libtpu: 0.0.40
codegen_flags: <defaults>
</compile_context>

<pallas_src>
import jax
import jax.numpy as jnp
from jax.experimental import pallas as pl
from jax.experimental.pallas import tpu as pltpu
import numpy as np


def _rup(x, m=8):
    return (x + m - 1) // m * m


def make_sequence_classifier(embed_dim, hidden_dim, num_classes, seq_len, batch):
    E, H, C, T, B = embed_dim, hidden_dim, num_classes, seq_len, batch
    G = 8 * H                       # fused gate width: [fwd i,f,o,g | bwd i,f,o,g]

    # Parameter slab row offsets (all multiples of 8 -> aligned sublane slices).
    R_WIH = 0                        # (E, 8H)   fused input-projection weight
    R_B = _rup(E)                    # (1, 8H)   fused bias (b_ih + b_hh, both dirs)
    R_WHH = _rup(R_B + 1)            # (H, 4H)   forward recurrent weight (cols 0:4H)
    R_WFC = _rup(R_WHH + H)          # (2H, C)   fc.weight^T                (cols 0:C)
    R_BFC = _rup(R_WFC + 2 * H)      # (1, C)    fc.bias                    (cols 0:C)
    P_ROWS = _rup(R_BFC + 1)

    def kernel(x_ref,    # (B, T, E)     batch_first embeddings
               p_ref,    # (P_ROWS, 8H)  packed parameter slab (f32)
               out_ref): # (B, C)        logits

        # ---- hoisted parameter reads (single VMEM slab, static slices) ----
        w_in = p_ref[R_WIH:R_WIH + E, :]              # (E, 8H)
        b_in = p_ref[R_B:R_B + 1, :]                  # (1, 8H)
        whh = p_ref[R_WHH:R_WHH + H, 0:4 * H]         # (H, 4H)
        wfc = p_ref[R_WFC:R_WFC + 2 * H, 0:C]         # (2H, C)
        bfc = p_ref[R_BFC:R_BFC + 1, 0:C]             # (1, C)

        # ---- ONE MXU matmul: input projection, BOTH directions, ALL T steps ----
        x = x_ref[...].reshape(B * T, E)              # batch-major rows (b*T + t)
        gin = jnp.dot(x, w_in, preferred_element_type=jnp.float32)   # (B*T, 8H)
        gates = gin.reshape(B, T, G) + b_in           # (B, T, 8H)

        def act(g):
            # gate order [i, f, o, g]; the g-block pre-activation was pre-scaled
            # by 2 in prepare_params, so ONE sigmoid over all 4H lanes plus a
            # VPU fma recovers tanh(x) = 2*sigmoid(2x) - 1.
            s = jax.nn.sigmoid(g)
            i = s[:, 0:H]
            f = s[:, H:2 * H]
            o = s[:, 2 * H:3 * H]
            gg = 2.0 * s[:, 3 * H:4 * H] - 1.0
            return i, f, o, gg

        # ---- forward LSTM recurrence, fully unrolled (T is compile-time) ----
        # t = 0: h_prev = c_prev = 0 -> skip the recurrent matmul & forget term.
        i, f, o, gg = act(gates[:, 0, 0:4 * H])
        c = i * gg
        h = o * jnp.tanh(c)
        for t in range(1, T):
            g = gates[:, t, 0:4 * H] + jnp.dot(
                h, whh, preferred_element_type=jnp.float32)
            i, f, o, gg = act(g)
            c = f * c + i * gg
            h = o * jnp.tanh(c)
        h_fwd = h

        # ---- backward-direction output at t = T-1 (one step from zero state) ----
        # NOTE: valid ONLY because the classifier reads lstm_out[:, -1, :]; the
        # backward cell at t = T-1 has h_prev = c_prev = 0, so the h@W_hh_b and
        # f*c_prev terms vanish (b_hh_b IS folded into the bias slab).  Do NOT
        # reuse this shortcut if the readout changes (e.g. pooling over time).
        ib, _, ob, ggb = act(gates[:, T - 1, 4 * H:8 * H])
        h_bwd = ob * jnp.tanh(ib * ggb)

        # Dropout(p=0.3) is eval/inference mode -> identity.
        # TODO(synk): training-mode dropout (random mask * 1/(1-p)) not emitted.

        # ---- fused FC: lane-concat (one vreg) then a single MXU matmul ----
        h_cat = jnp.concatenate([h_fwd, h_bwd], axis=-1)          # (B, 2H)
        out_ref[...] = (jnp.dot(h_cat, wfc, preferred_element_type=jnp.float32)
                        + bfc)

    call = pl.pallas_call(
        kernel,
        out_shape=jax.ShapeDtypeStruct((B, C), jnp.float32),
        in_specs=[pl.BlockSpec(memory_space=pltpu.MemorySpace.VMEM),
                  pl.BlockSpec(memory_space=pltpu.MemorySpace.VMEM)],
        out_specs=pl.BlockSpec(memory_space=pltpu.MemorySpace.VMEM),
    )

    def prepare_params(params):
        """One-time parameter preprocessing (hoisted off the per-call path):
        gate reorder [i,f,g,o] -> [i,f,o,g], g-block x2 pre-scale (tanh via
        2*sigmoid(2x)-1), fwd|bwd W_ih fusion, bias fusion, FC transpose, and
        packing of everything into a single (P_ROWS, 8H) f32 VMEM slab."""
        (w_ih_f, w_hh_f, b_ih_f, b_hh_f,
         w_ih_b, w_hh_b, b_ih_b, b_hh_b, w_fc, b_fc) = params

        def reorder_scale(w):
            # leading axis is 4H in PyTorch gate blocks [i, f, g, o]
            return jnp.concatenate(
                [w[0:H], w[H:2 * H], w[3 * H:4 * H], 2.0 * w[2 * H:3 * H]],
                axis=0)

        wih = jnp.concatenate(
            [jnp.transpose(reorder_scale(w_ih_f)),     # (E, 4H) forward
             jnp.transpose(reorder_scale(w_ih_b))],    # (E, 4H) backward
            axis=1)                                    # (E, 8H)
        bias = jnp.concatenate(
            [reorder_scale(b_ih_f + b_hh_f),
             reorder_scale(b_ih_b + b_hh_b)], axis=0)  # (8H,)
        whh = jnp.transpose(reorder_scale(w_hh_f))     # (H, 4H)
        wfc_t = jnp.transpose(w_fc)                    # (2H, C)

        slab = jnp.zeros((P_ROWS, G), jnp.float32)
        slab = slab.at[R_WIH:R_WIH + E, :].set(wih.astype(jnp.float32))
        slab = slab.at[R_B, :].set(bias.astype(jnp.float32))
        slab = slab.at[R_WHH:R_WHH + H, 0:4 * H].set(whh.astype(jnp.float32))
        slab = slab.at[R_WFC:R_WFC + 2 * H, 0:C].set(wfc_t.astype(jnp.float32))
        slab = slab.at[R_BFC, 0:C].set(b_fc.astype(jnp.float32))
        return slab

    @jax.jit
    def forward(embeddings, slab):
        # embeddings: (B, T, E), batch_first like the PyTorch module.
        # No host-side transpose/reshape — the kernel consumes it directly.
        return call(embeddings.astype(jnp.float32), slab)

    return forward, prepare_params


def reference_forward(embeddings, params, hidden_dim):
    """Pure-JAX reference matching nn.LSTM(bidirectional) -> last step -> Linear."""
    (w_ih_f, w_hh_f, b_ih_f, b_hh_f,
     w_ih_b, w_hh_b, b_ih_b, b_hh_b, w_fc, b_fc) = params
    H = hidden_dim
    B, T, E = embeddings.shape

    def run_dir(x_seq, w_ih, w_hh, b_ih, b_hh):
        h = jnp.zeros((B, H)); c = jnp.zeros((B, H))
        outs = []
        for t in range(x_seq.shape[1]):
            g = x_seq[:, t, :] @ w_ih.T + h @ w_hh.T + b_ih + b_hh
            i = jax.nn.sigmoid(g[:, 0 * H:1 * H])
            f = jax.nn.sigmoid(g[:, 1 * H:2 * H])
            gg = jnp.tanh(g[:, 2 * H:3 * H])
            o = jax.nn.sigmoid(g[:, 3 * H:4 * H])
            c = f * c + i * gg
            h = o * jnp.tanh(c)
            outs.append(h)
        return jnp.stack(outs, axis=1)                       # (B, T, H)

    out_f = run_dir(embeddings, w_ih_f, w_hh_f, b_ih_f, b_hh_f)
    out_b = run_dir(embeddings[:, ::-1, :], w_ih_b, w_hh_b, b_ih_b, b_hh_b)[:, ::-1, :]
    lstm_out = jnp.concatenate([out_f, out_b], axis=-1)      # (B, T, 2H)
    final = lstm_out[:, -1, :]                               # dropout = identity (eval)
    return final @ w_fc.T + b_fc


if __name__ == "__main__":
    B, T, E, H, C = 2, 8, 16, 32, 4

    key = jax.random.PRNGKey(0)
    keys = jax.random.split(key, 12)
    s = 1.0 / np.sqrt(H)  # PyTorch LSTM/Linear uniform init scale

    def u(k, shape):
        return jax.random.uniform(k, shape, jnp.float32, -s, s)

    params = (
        u(keys[0], (4 * H, E)),   # weight_ih_l0
        u(keys[1], (4 * H, H)),   # weight_hh_l0
        u(keys[2], (4 * H,)),     # bias_ih_l0
        u(keys[3], (4 * H,)),     # bias_hh_l0
        u(keys[4], (4 * H, E)),   # weight_ih_l0_reverse
        u(keys[5], (4 * H, H)),   # weight_hh_l0_reverse
        u(keys[6], (4 * H,)),     # bias_ih_l0_reverse
        u(keys[7], (4 * H,)),     # bias_hh_l0_reverse
        u(keys[8], (C, 2 * H)),   # fc.weight
        u(keys[9], (C,)),         # fc.bias
    )

    embeddings = jax.random.normal(keys[10], (B, T, E), jnp.float32)

    forward, prepare_params = make_sequence_classifier(E, H, C, T, B)

    # One-time parameter prep -> single packed VMEM slab.
    slab = jax.block_until_ready(prepare_params(params))

    logits = forward(embeddings, slab)
    logits = jax.block_until_ready(logits)

    ref = reference_forward(embeddings, params, H)
    # Slightly loosened vs 1e-5: tanh is computed as 2*sigmoid(2x)-1 (~1e-6 drift).
    np.testing.assert_allclose(np.asarray(logits), np.asarray(ref),
                               rtol=1e-4, atol=2e-5)

    print("KERNEL_OK")
</pallas_src>

<mosaic_0001>
module attributes {stable_mosaic.version = 11 : i64} {
  func.func @kernel(%arg0: memref<2x8x16xf32, #tpu.memory_space<vmem>>, %arg1: memref<128x256xf32, #tpu.memory_space<vmem>>, %arg2: memref<2x4xf32, #tpu.memory_space<vmem>>) attributes {dimension_semantics = [], scalar_prefetch = 0 : i64, scratch_operands = 0 : i64, tpu.core_type = #tpu.core_type<tc>} {
    %c0 = arith.constant 0 : index
    %c0_0 = arith.constant 0 : index
    %0 = vector.load %arg1[%c0, %c0_0] : memref<128x256xf32, #tpu.memory_space<vmem>>, vector<16x256xf32>
    %c16 = arith.constant 16 : index
    %c0_1 = arith.constant 0 : index
    %1 = vector.load %arg1[%c16, %c0_1] : memref<128x256xf32, #tpu.memory_space<vmem>>, vector<1x256xf32>
    %c24 = arith.constant 24 : index
    %c0_2 = arith.constant 0 : index
    %2 = vector.load %arg1[%c24, %c0_2] : memref<128x256xf32, #tpu.memory_space<vmem>>, vector<32x128xf32>
    %c56 = arith.constant 56 : index
    %c0_3 = arith.constant 0 : index
    %3 = vector.load %arg1[%c56, %c0_3] : memref<128x256xf32, #tpu.memory_space<vmem>>, vector<64x4xf32>
    %c120 = arith.constant 120 : index
    %c0_4 = arith.constant 0 : index
    %4 = vector.load %arg1[%c120, %c0_4] : memref<128x256xf32, #tpu.memory_space<vmem>>, vector<1x4xf32>
    %c0_5 = arith.constant 0 : index
    %c0_6 = arith.constant 0 : index
    %c0_7 = arith.constant 0 : index
    %5 = vector.load %arg0[%c0_5, %c0_6, %c0_7] : memref<2x8x16xf32, #tpu.memory_space<vmem>>, vector<2x8x16xf32>
    %6 = vector.shape_cast %5 : vector<2x8x16xf32> to vector<16x16xf32>
    %cst = arith.constant dense<0.000000e+00> : vector<16x256xf32>
    %7 = tpu.matmul %6, %0, %cst {dimension_numbers = #tpu.dot_dimension_numbers<[1], [0], [0], [1], [0, 0, 1, 1], [], []>} : vector<16x16xf32>, vector<16x256xf32>, vector<16x256xf32> -> vector<16x256xf32>
    %8 = vector.shape_cast %7 : vector<16x256xf32> to vector<2x8x256xf32>
    %9 = vector.shape_cast %1 : vector<1x256xf32> to vector<1x1x256xf32>
    %10 = vector.broadcast %9 : vector<1x1x256xf32> to vector<2x8x256xf32>
    %11 = arith.addf %8, %10 : vector<2x8x256xf32>
    %12 = vector.extract_strided_slice %11 {offsets = [0, 0, 0], sizes = [2, 1, 128], strides = [1, 1, 1]} : vector<2x8x256xf32> to vector<2x1x128xf32>
    %13 = vector.shape_cast %12 : vector<2x1x128xf32> to vector<2x128xf32>
    %14 = arith.negf %13 : vector<2x128xf32>
    %15 = math.exp %14 : vector<2x128xf32>
    %cst_8 = arith.constant 1.000000e+00 : f32
    %16 = vector.broadcast %cst_8 : f32 to vector<2x128xf32>
    %17 = arith.addf %16, %15 : vector<2x128xf32>
    %18 = arith.divf %16, %17 : vector<2x128xf32>
    %19 = vector.extract_strided_slice %18 {offsets = [0, 0], sizes = [2, 32], strides = [1, 1]} : vector<2x128xf32> to vector<2x32xf32>
    %20 = vector.extract_strided_slice %18 {offsets = [0, 64], sizes = [2, 32], strides = [1, 1]} : vector<2x128xf32> to vector<2x32xf32>
    %21 = vector.extract_strided_slice %18 {offsets = [0, 96], sizes = [2, 32], strides = [1, 1]} : vector<2x128xf32> to vector<2x32xf32>
    %cst_9 = arith.constant 2.000000e+00 : f32
    %22 = vector.broadcast %cst_9 : f32 to vector<2x32xf32>
    %23 = arith.mulf %22, %21 : vector<2x32xf32>
    %cst_10 = arith.constant 1.000000e+00 : f32
    %24 = vector.broadcast %cst_10 : f32 to vector<2x32xf32>
    %25 = arith.subf %23, %24 : vector<2x32xf32>
    %26 = arith.mulf %19, %25 : vector<2x32xf32>
    %27 = math.tanh %26 : vector<2x32xf32>
    %28 = arith.mulf %20, %27 : vector<2x32xf32>
    %29 = vector.extract_strided_slice %11 {offsets = [0, 1, 0], sizes = [2, 1, 128], strides = [1, 1, 1]} : vector<2x8x256xf32> to vector<2x1x128xf32>
    %30 = vector.shape_cast %29 : vector<2x1x128xf32> to vector<2x128xf32>
    %cst_11 = arith.constant dense<0.000000e+00> : vector<2x128xf32>
    %31 = tpu.matmul %28, %2, %cst_11 {dimension_numbers = #tpu.dot_dimension_numbers<[1], [0], [0], [1], [0, 0, 1, 1], [], []>} : vector<2x32xf32>, vector<32x128xf32>, vector<2x128xf32> -> vector<2x128xf32>
    %32 = arith.addf %30, %31 : vector<2x128xf32>
    %33 = arith.negf %32 : vector<2x128xf32>
    %34 = math.exp %33 : vector<2x128xf32>
    %cst_12 = arith.constant 1.000000e+00 : f32
    %35 = vector.broadcast %cst_12 : f32 to vector<2x128xf32>
    %36 = arith.addf %35, %34 : vector<2x128xf32>
    %37 = arith.divf %35, %36 : vector<2x128xf32>
    %38 = vector.extract_strided_slice %37 {offsets = [0, 0], sizes = [2, 32], strides = [1, 1]} : vector<2x128xf32> to vector<2x32xf32>
    %39 = vector.extract_strided_slice %37 {offsets = [0, 32], sizes = [2, 32], strides = [1, 1]} : vector<2x128xf32> to vector<2x32xf32>
    %40 = vector.extract_strided_slice %37 {offsets = [0, 64], sizes = [2, 32], strides = [1, 1]} : vector<2x128xf32> to vector<2x32xf32>
    %41 = vector.extract_strided_slice %37 {offsets = [0, 96], sizes = [2, 32], strides = [1, 1]} : vector<2x128xf32> to vector<2x32xf32>
    %cst_13 = arith.constant 2.000000e+00 : f32
    %42 = vector.broadcast %cst_13 : f32 to vector<2x32xf32>
    %43 = arith.mulf %42, %41 : vector<2x32xf32>
    %cst_14 = arith.constant 1.000000e+00 : f32
    %44 = vector.broadcast %cst_14 : f32 to vector<2x32xf32>
    %45 = arith.subf %43, %44 : vector<2x32xf32>
    %46 = arith.mulf %39, %26 : vector<2x32xf32>
    %47 = arith.mulf %38, %45 : vector<2x32xf32>
    %48 = arith.addf %46, %47 : vector<2x32xf32>
    %49 = math.tanh %48 : vector<2x32xf32>
    %50 = arith.mulf %40, %49 : vector<2x32xf32>
    %51 = vector.extract_strided_slice %11 {offsets = [0, 2, 0], sizes = [2, 1, 128], strides = [1, 1, 1]} : vector<2x8x256xf32> to vector<2x1x128xf32>
    %52 = vector.shape_cast %51 : vector<2x1x128xf32> to vector<2x128xf32>
    %cst_15 = arith.constant dense<0.000000e+00> : vector<2x128xf32>
    %53 = tpu.matmul %50, %2, %cst_15 {dimension_numbers = #tpu.dot_dimension_numbers<[1], [0], [0], [1], [0, 0, 1, 1], [], []>} : vector<2x32xf32>, vector<32x128xf32>, vector<2x128xf32> -> vector<2x128xf32>
    %54 = arith.addf %52, %53 : vector<2x128xf32>
    %55 = arith.negf %54 : vector<2x128xf32>
    %56 = math.exp %55 : vector<2x128xf32>
    %cst_16 = arith.constant 1.000000e+00 : f32
    %57 = vector.broadcast %cst_16 : f32 to vector<2x128xf32>
    %58 = arith.addf %57, %56 : vector<2x128xf32>
    %59 = arith.divf %57, %58 : vector<2x128xf32>
    %60 = vector.extract_strided_slice %59 {offsets = [0, 0], sizes = [2, 32], strides = [1, 1]} : vector<2x128xf32> to vector<2x32xf32>
    %61 = vector.extract_strided_slice %59 {offsets = [0, 32], sizes = [2, 32], strides = [1, 1]} : vector<2x128xf32> to vector<2x32xf32>
    %62 = vector.extract_strided_slice %59 {offsets = [0, 64], sizes = [2, 32], strides = [1, 1]} : vector<2x128xf32> to vector<2x32xf32>
    %63 = vector.extract_strided_slice %59 {offsets = [0, 96], sizes = [2, 32], strides = [1, 1]} : vector<2x128xf32> to vector<2x32xf32>
    %cst_17 = arith.constant 2.000000e+00 : f32
    %64 = vector.broadcast %cst_17 : f32 to vector<2x32xf32>
    %65 = arith.mulf %64, %63 : vector<2x32xf32>
    %cst_18 = arith.constant 1.000000e+00 : f32
    %66 = vector.broadcast %cst_18 : f32 to vector<2x32xf32>
    %67 = arith.subf %65, %66 : vector<2x32xf32>
    %68 = arith.mulf %61, %48 : vector<2x32xf32>
    %69 = arith.mulf %60, %67 : vector<2x32xf32>
    %70 = arith.addf %68, %69 : vector<2x32xf32>
    %71 = math.tanh %70 : vector<2x32xf32>
    %72 = arith.mulf %62, %71 : vector<2x32xf32>
    %73 = vector.extract_strided_slice %11 {offsets = [0, 3, 0], sizes = [2, 1, 128], strides = [1, 1, 1]} : vector<2x8x256xf32> to vector<2x1x128xf32>
    %74 = vector.shape_cast %73 : vector<2x1x128xf32> to vector<2x128xf32>
    %cst_19 = arith.constant dense<0.000000e+00> : vector<2x128xf32>
    %75 = tpu.matmul %72, %2, %cst_19 {dimension_numbers = #tpu.dot_dimension_numbers<[1], [0], [0], [1], [0, 0, 1, 1], [], []>} : vector<2x32xf32>, vector<32x128xf32>, vector<2x128xf32> -> vector<2x128xf32>
    %76 = arith.addf %74, %75 : vector<2x128xf32>
    %77 = arith.negf %76 : vector<2x128xf32>
    %78 = math.exp %77 : vector<2x128xf32>
    %cst_20 = arith.constant 1.000000e+00 : f32
    %79 = vector.broadcast %cst_20 : f32 to vector<2x128xf32>
    %80 = arith.addf %79, %78 : vector<2x128xf32>
    %81 = arith.divf %79, %80 : vector<2x128xf32>
    %82 = vector.extract_strided_slice %81 {offsets = [0, 0], sizes = [2, 32], strides = [1, 1]} : vector<2x128xf32> to vector<2x32xf32>
    %83 = vector.extract_strided_slice %81 {offsets = [0, 32], sizes = [2, 32], strides = [1, 1]} : vector<2x128xf32> to vector<2x32xf32>
    %84 = vector.extract_strided_slice %81 {offsets = [0, 64], sizes = [2, 32], strides = [1, 1]} : vector<2x128xf32> to vector<2x32xf32>
    %85 = vector.extract_strided_slice %81 {offsets = [0, 96], sizes = [2, 32], strides = [1, 1]} : vector<2x128xf32> to vector<2x32xf32>
    %cst_21 = arith.constant 2.000000e+00 : f32
    %86 = vector.broadcast %cst_21 : f32 to vector<2x32xf32>
    %87 = arith.mulf %86, %85 : vector<2x32xf32>
    %cst_22 = arith.constant 1.000000e+00 : f32
    %88 = vector.broadcast %cst_22 : f32 to vector<2x32xf32>
    %89 = arith.subf %87, %88 : vector<2x32xf32>
    %90 = arith.mulf %83, %70 : vector<2x32xf32>
    %91 = arith.mulf %82, %89 : vector<2x32xf32>
    %92 = arith.addf %90, %91 : vector<2x32xf32>
    %93 = math.tanh %92 : vector<2x32xf32>
    %94 = arith.mulf %84, %93 : vector<2x32xf32>
    %95 = vector.extract_strided_slice %11 {offsets = [0, 4, 0], sizes = [2, 1, 128], strides = [1, 1, 1]} : vector<2x8x256xf32> to vector<2x1x128xf32>
    %96 = vector.shape_cast %95 : vector<2x1x128xf32> to vector<2x128xf32>
    %cst_23 = arith.constant dense<0.000000e+00> : vector<2x128xf32>
    %97 = tpu.matmul %94, %2, %cst_23 {dimension_numbers = #tpu.dot_dimension_numbers<[1], [0], [0], [1], [0, 0, 1, 1], [], []>} : vector<2x32xf32>, vector<32x128xf32>, vector<2x128xf32> -> vector<2x128xf32>
    %98 = arith.addf %96, %97 : vector<2x128xf32>
    %99 = arith.negf %98 : vector<2x128xf32>
    %100 = math.exp %99 : vector<2x128xf32>
    %cst_24 = arith.constant 1.000000e+00 : f32
    %101 = vector.broadcast %cst_24 : f32 to vector<2x128xf32>
    %102 = arith.addf %101, %100 : vector<2x128xf32>
    %103 = arith.divf %101, %102 : vector<2x128xf32>
    %104 = vector.extract_strided_slice %103 {offsets = [0, 0], sizes = [2, 32], strides = [1, 1]} : vector<2x128xf32> to vector<2x32xf32>
    %105 = vector.extract_strided_slice %103 {offsets = [0, 32], sizes = [2, 32], strides = [1, 1]} : vector<2x128xf32> to vector<2x32xf32>
    %106 = vector.extract_strided_slice %103 {offsets = [0, 64], sizes = [2, 32], strides = [1, 1]} : vector<2x128xf32> to vector<2x32xf32>
    %107 = vector.extract_strided_slice %103 {offsets = [0, 96], sizes = [2, 32], strides = [1, 1]} : vector<2x128xf32> to vector<2x32xf32>
    %cst_25 = arith.constant 2.000000e+00 : f32
    %108 = vector.broadcast %cst_25 : f32 to vector<2x32xf32>
    %109 = arith.mulf %108, %107 : vector<2x32xf32>
    %cst_26 = arith.constant 1.000000e+00 : f32
    %110 = vector.broadcast %cst_26 : f32 to vector<2x32xf32>
    %111 = arith.subf %109, %110 : vector<2x32xf32>
    %112 = arith.mulf %105, %92 : vector<2x32xf32>
    %113 = arith.mulf %104, %111 : vector<2x32xf32>
    %114 = arith.addf %112, %113 : vector<2x32xf32>
    %115 = math.tanh %114 : vector<2x32xf32>
    %116 = arith.mulf %106, %115 : vector<2x32xf32>
    %117 = vector.extract_strided_slice %11 {offsets = [0, 5, 0], sizes = [2, 1, 128], strides = [1, 1, 1]} : vector<2x8x256xf32> to vector<2x1x128xf32>
    %118 = vector.shape_cast %117 : vector<2x1x128xf32> to vector<2x128xf32>
    %cst_27 = arith.constant dense<0.000000e+00> : vector<2x128xf32>
    %119 = tpu.matmul %116, %2, %cst_27 {dimension_numbers = #tpu.dot_dimension_numbers<[1], [0], [0], [1], [0, 0, 1, 1], [], []>} : vector<2x32xf32>, vector<32x128xf32>, vector<2x128xf32> -> vector<2x128xf32>
    %120 = arith.addf %118, %119 : vector<2x128xf32>
    %121 = arith.negf %120 : vector<2x128xf32>
    %122 = math.exp %121 : vector<2x128xf32>
    %cst_28 = arith.constant 1.000000e+00 : f32
    %123 = vector.broadcast %cst_28 : f32 to vector<2x128xf32>
    %124 = arith.addf %123, %122 : vector<2x128xf32>
    %125 = arith.divf %123, %124 : vector<2x128xf32>
    %126 = vector.extract_strided_slice %125 {offsets = [0, 0], sizes = [2, 32], strides = [1, 1]} : vector<2x128xf32> to vector<2x32xf32>
    %127 = vector.extract_strided_slice %125 {offsets = [0, 32], sizes = [2, 32], strides = [1, 1]} : vector<2x128xf32> to vector<2x32xf32>
    %128 = vector.extract_strided_slice %125 {offsets = [0, 64], sizes = [2, 32], strides = [1, 1]} : vector<2x128xf32> to vector<2x32xf32>
    %129 = vector.extract_strided_slice %125 {offsets = [0, 96], sizes = [2, 32], strides = [1, 1]} : vector<2x128xf32> to vector<2x32xf32>
    %cst_29 = arith.constant 2.000000e+00 : f32
    %130 = vector.broadcast %cst_29 : f32 to vector<2x32xf32>
    %131 = arith.mulf %130, %129 : vector<2x32xf32>
    %cst_30 = arith.constant 1.000000e+00 : f32
    %132 = vector.broadcast %cst_30 : f32 to vector<2x32xf32>
    %133 = arith.subf %131, %132 : vector<2x32xf32>
    %134 = arith.mulf %127, %114 : vector<2x32xf32>
    %135 = arith.mulf %126, %133 : vector<2x32xf32>
    %136 = arith.addf %134, %135 : vector<2x32xf32>
    %137 = math.tanh %136 : vector<2x32xf32>
    %138 = arith.mulf %128, %137 : vector<2x32xf32>
    %139 = vector.extract_strided_slice %11 {offsets = [0, 6, 0], sizes = [2, 1, 128], strides = [1, 1, 1]} : vector<2x8x256xf32> to vector<2x1x128xf32>
    %140 = vector.shape_cast %139 : vector<2x1x128xf32> to vector<2x128xf32>
    %cst_31 = arith.constant dense<0.000000e+00> : vector<2x128xf32>
    %141 = tpu.matmul %138, %2, %cst_31 {dimension_numbers = #tpu.dot_dimension_numbers<[1], [0], [0], [1], [0, 0, 1, 1], [], []>} : vector<2x32xf32>, vector<32x128xf32>, vector<2x128xf32> -> vector<2x128xf32>
    %142 = arith.addf %140, %141 : vector<2x128xf32>
    %143 = arith.negf %142 : vector<2x128xf32>
    %144 = math.exp %143 : vector<2x128xf32>
    %cst_32 = arith.constant 1.000000e+00 : f32
    %145 = vector.broadcast %cst_32 : f32 to vector<2x128xf32>
    %146 = arith.addf %145, %144 : vector<2x128xf32>
    %147 = arith.divf %145, %146 : vector<2x128xf32>
    %148 = vector.extract_strided_slice %147 {offsets = [0, 0], sizes = [2, 32], strides = [1, 1]} : vector<2x128xf32> to vector<2x32xf32>
    %149 = vector.extract_strided_slice %147 {offsets = [0, 32], sizes = [2, 32], strides = [1, 1]} : vector<2x128xf32> to vector<2x32xf32>
    %150 = vector.extract_strided_slice %147 {offsets = [0, 64], sizes = [2, 32], strides = [1, 1]} : vector<2x128xf32> to vector<2x32xf32>
    %151 = vector.extract_strided_slice %147 {offsets = [0, 96], sizes = [2, 32], strides = [1, 1]} : vector<2x128xf32> to vector<2x32xf32>
    %cst_33 = arith.constant 2.000000e+00 : f32
    %152 = vector.broadcast %cst_33 : f32 to vector<2x32xf32>
    %153 = arith.mulf %152, %151 : vector<2x32xf32>
    %cst_34 = arith.constant 1.000000e+00 : f32
    %154 = vector.broadcast %cst_34 : f32 to vector<2x32xf32>
    %155 = arith.subf %153, %154 : vector<2x32xf32>
    %156 = arith.mulf %149, %136 : vector<2x32xf32>
    %157 = arith.mulf %148, %155 : vector<2x32xf32>
    %158 = arith.addf %156, %157 : vector<2x32xf32>
    %159 = math.tanh %158 : vector<2x32xf32>
    %160 = arith.mulf %150, %159 : vector<2x32xf32>
    %161 = vector.extract_strided_slice %11 {offsets = [0, 7, 0], sizes = [2, 1, 128], strides = [1, 1, 1]} : vector<2x8x256xf32> to vector<2x1x128xf32>
    %162 = vector.shape_cast %161 : vector<2x1x128xf32> to vector<2x128xf32>
    %cst_35 = arith.constant dense<0.000000e+00> : vector<2x128xf32>
    %163 = tpu.matmul %160, %2, %cst_35 {dimension_numbers = #tpu.dot_dimension_numbers<[1], [0], [0], [1], [0, 0, 1, 1], [], []>} : vector<2x32xf32>, vector<32x128xf32>, vector<2x128xf32> -> vector<2x128xf32>
    %164 = arith.addf %162, %163 : vector<2x128xf32>
    %165 = arith.negf %164 : vector<2x128xf32>
    %166 = math.exp %165 : vector<2x128xf32>
    %cst_36 = arith.constant 1.000000e+00 : f32
    %167 = vector.broadcast %cst_36 : f32 to vector<2x128xf32>
    %168 = arith.addf %167, %166 : vector<2x128xf32>
    %169 = arith.divf %167, %168 : vector<2x128xf32>
    %170 = vector.extract_strided_slice %169 {offsets = [0, 0], sizes = [2, 32], strides = [1, 1]} : vector<2x128xf32> to vector<2x32xf32>
    %171 = vector.extract_strided_slice %169 {offsets = [0, 32], sizes = [2, 32], strides = [1, 1]} : vector<2x128xf32> to vector<2x32xf32>
    %172 = vector.extract_strided_slice %169 {offsets = [0, 64], sizes = [2, 32], strides = [1, 1]} : vector<2x128xf32> to vector<2x32xf32>
    %173 = vector.extract_strided_slice %169 {offsets = [0, 96], sizes = [2, 32], strides = [1, 1]} : vector<2x128xf32> to vector<2x32xf32>
    %cst_37 = arith.constant 2.000000e+00 : f32
    %174 = vector.broadcast %cst_37 : f32 to vector<2x32xf32>
    %175 = arith.mulf %174, %173 : vector<2x32xf32>
    %cst_38 = arith.constant 1.000000e+00 : f32
    %176 = vector.broadcast %cst_38 : f32 to vector<2x32xf32>
    %177 = arith.subf %175, %176 : vector<2x32xf32>
    %178 = arith.mulf %171, %158 : vector<2x32xf32>
    %179 = arith.mulf %170, %177 : vector<2x32xf32>
    %180 = arith.addf %178, %179 : vector<2x32xf32>
    %181 = math.tanh %180 : vector<2x32xf32>
    %182 = arith.mulf %172, %181 : vector<2x32xf32>
    %183 = vector.extract_strided_slice %11 {offsets = [0, 7, 128], sizes = [2, 1, 128], strides = [1, 1, 1]} : vector<2x8x256xf32> to vector<2x1x128xf32>
    %184 = vector.shape_cast %183 : vector<2x1x128xf32> to vector<2x128xf32>
    %185 = arith.negf %184 : vector<2x128xf32>
    %186 = math.exp %185 : vector<2x128xf32>
    %cst_39 = arith.constant 1.000000e+00 : f32
    %187 = vector.broadcast %cst_39 : f32 to vector<2x128xf32>
    %188 = arith.addf %187, %186 : vector<2x128xf32>
    %189 = arith.divf %187, %188 : vector<2x128xf32>
    %190 = vector.extract_strided_slice %189 {offsets = [0, 0], sizes = [2, 32], strides = [1, 1]} : vector<2x128xf32> to vector<2x32xf32>
    %191 = vector.extract_strided_slice %189 {offsets = [0, 64], sizes = [2, 32], strides = [1, 1]} : vector<2x128xf32> to vector<2x32xf32>
    %192 = vector.extract_strided_slice %189 {offsets = [0, 96], sizes = [2, 32], strides = [1, 1]} : vector<2x128xf32> to vector<2x32xf32>
    %cst_40 = arith.constant 2.000000e+00 : f32
    %193 = vector.broadcast %cst_40 : f32 to vector<2x32xf32>
    %194 = arith.mulf %193, %192 : vector<2x32xf32>
    %cst_41 = arith.constant 1.000000e+00 : f32
    %195 = vector.broadcast %cst_41 : f32 to vector<2x32xf32>
    %196 = arith.subf %194, %195 : vector<2x32xf32>
    %197 = arith.mulf %190, %196 : vector<2x32xf32>
    %198 = math.tanh %197 : vector<2x32xf32>
    %199 = arith.mulf %191, %198 : vector<2x32xf32>
    %200 = tpu.concatenate %182, %199 in 1 : vector<2x32xf32>, vector<2x32xf32> -> vector<2x64xf32>
    %cst_42 = arith.constant dense<0.000000e+00> : vector<2x4xf32>
    %201 = tpu.matmul %200, %3, %cst_42 {dimension_numbers = #tpu.dot_dimension_numbers<[1], [0], [0], [1], [0, 0, 1, 1], [], []>} : vector<2x64xf32>, vector<64x4xf32>, vector<2x4xf32> -> vector<2x4xf32>
    %202 = vector.broadcast %4 : vector<1x4xf32> to vector<2x4xf32>
    %203 = arith.addf %201, %202 : vector<2x4xf32>
    %c0_43 = arith.constant 0 : index
    %c0_44 = arith.constant 0 : index
    %204 = vector.load %arg2[%c0_43, %c0_44] : memref<2x4xf32, #tpu.memory_space<vmem>>, vector<2x4xf32>
    tpu.vector_store %arg2[%c0_43, %c0_44], %203 {strides = array<i32>} : memref<2x4xf32, #tpu.memory_space<vmem>>, vector<2x4xf32>,
    return
  }
}

</mosaic_0001>

<llo_original>
// kernel: forward.1
$region0: #{forward.1}
  #allocation0 [shape = 'u32[]', space=smem, size = 0x4, offset = 0x4, fixed_abs, tag = 'smem constant byte address 0x4 - core index']
  #allocation1 [shape = 'u32[72,128]{1,0:T(1,128)}', space=vmem, size = 0x9000, scoped, tag = 'internal scratch']
  %s0 = inlined_call_operand.hbm [shape: f32[2,8,16], index: 0, kind: input, shape index: {}]
  %s1 = inlined_call_operand.hbm [shape: f32[128,256], index: 1, kind: input, shape index: {}]
  %s2 = inlined_call_operand.hbm [shape: f32[2,4], index: 2, kind: output, shape index: {}]
  %s3 = sld [smem:[#allocation0]]
  $region26: #{forward.1} parent=0
    _
  %s5 = ssub.s32 1, %s3
  %s6 = scalar_select 0, %s5, %s3
  $region1: #{forward.1} parent=0
    #allocation2 [shape = 'u8[8192]{0}', space=vmem, size = 0x2000, scoped, tag = 'input window, operand 0, single buffered']
    #allocation3 [shape = 's32[1]{0}', space=sflag, size = 0x4, scoped, tag = 'scoped memory for forward.1']
    #allocation4 [shape = 's32[1]{0}', space=sflag, size = 0x4, scoped, tag = 'scoped memory for forward.1']
    #allocation5 [shape = 'u8[131072]{0}', space=vmem, size = 0x20000, scoped, tag = 'input window, operand 1, single buffered']
    #allocation6 [shape = 's32[1]{0}', space=sflag, size = 0x4, scoped, tag = 'scoped memory for forward.1']
    #allocation7 [shape = 'u8[1024]{0}', space=vmem, size = 0x400, scoped, tag = 'output window, operand 0, single buffered']
    %7 = vsyncpa [#allocation3], 0
    %8 = vsyncpa [#allocation6], 0
    %9 = vsyncpa [#allocation4], 0
    // Predicated region
    $region2: #{forward.1} parent=1 // pred_check
      _
    $region3: #{forward.1} parent=1 // pred_check_branch
      %11 = sbr.rel (0) target = $region5
    $region4: #{forward.1} parent=1 // pred_region
      %13 = vsyncadd [#allocation3], 0
      %s14 = sshll.u32 %s0, 4
      %s15 = int_to_ptr.hbm [resolvable:$true] %s14
      %s16 = sshll.u32 [#allocation2], 4
      %s17 = int_to_ptr.vmem [resolvable:$true] %s16
      %22 = dma.hbm_to_vmem [thread:$0]  %s15, 256, %s17, [#allocation3], 128, 128, 8
    $region5: #{forward.1} parent=1 // pred_fallthru
      _
    // Predicated region
    $region6: #{forward.1} parent=1 // pred_check
      _
    $region7: #{forward.1} parent=1 // pred_check_branch
      %24 = sbr.rel (0) target = $region9
    $region8: #{forward.1} parent=1 // pred_region
      %26 = vsyncadd [#allocation6], 0
      %s27 = sshll.u32 %s1, 4
      %s28 = int_to_ptr.hbm [resolvable:$true] %s27
      %s29 = sshll.u32 [#allocation5], 4
      %s30 = int_to_ptr.vmem [resolvable:$true] %s29
      %35 = dma.hbm_to_vmem [thread:$0]  %s28, 4096, %s30, [#allocation6], 256, 256, 16
    $region9: #{forward.1} parent=1 // pred_fallthru
      _
    // Predicated region
    $region10: #{forward.1} parent=1 // pred_check
      _
    $region11: #{forward.1} parent=1 // pred_check_branch
      %37 = sbr.rel (0) target = $region13
    $region12: #{forward.1} parent=1 // pred_region
      %39 = dma.done [#allocation3], 256
    $region13: #{forward.1} parent=1 // pred_fallthru
      _
    // Predicated region
    $region14: #{forward.1} parent=1 // pred_check
      _
    $region15: #{forward.1} parent=1 // pred_check_branch
      %41 = sbr.rel (0) target = $region17
    $region16: #{forward.1} parent=1 // pred_region
      %43 = dma.done [#allocation6], 4096
    $region17: #{forward.1} parent=1 // pred_fallthru
      _
    %v44 = vld [vmem:[#allocation5] sm:$0xff]
    %v45 = vld [vmem:[#allocation5 + $0x8] sm:$0xff]
    %v46 = vld [vmem:[#allocation5 + $0x10] sm:$0xff]
    %v47 = vld [vmem:[#allocation5 + $0x18] sm:$0xff]
    %s48 = scalar_lea.vmem [#allocation5], 32
    %v49 = vld [vmem:[%s48] ss:$8 sm:$0x3]
    %v50 = vld [vmem:[#allocation5 + $0x30] sm:$0xff]
    %v51 = vld [vmem:[#allocation5 + $0x40] sm:$0xff]
    %v52 = vld [vmem:[#allocation5 + $0x50] sm:$0xff]
    %v53 = vld [vmem:[#allocation5 + $0x60] sm:$0xff]
    %v54 = vld [vmem:[#allocation5 + $0x70] sm:$0xff]
    %v55 = vld [vmem:[#allocation5 + $0x80] sm:$0xff]
    %v56 = vld [vmem:[#allocation5 + $0x90] sm:$0xff]
    %v57 = vld [vmem:[#allocation5 + $0xa0] sm:$0xff]
    %v58 = vld [vmem:[#allocation5 + $0xb0] sm:$0xff]
    %v59 = vld [vmem:[#allocation5 + $0xc0] sm:$0xff]
    %v60 = vld [vmem:[#allocation5 + $0xd0] sm:$0xff]
    %v61 = vld [vmem:[#allocation5 + $0xe0] sm:$0xff]
    %v62 = vld [vmem:[#allocation5 + $0xf0] ss:$0 sm:$0xff]
    %v63 = vld [vmem:[#allocation2] sm:$0xff]
    %v64 = vld [vmem:[#allocation2 + $0x8] sm:$0xff]
    %vm65 = vcmask 130048
    %v67 = vsel %vm65, %v63, 0
    %v70 = vsel %vm65, %v64, 0
    %72 = vmatpush.msra.mxu0 0.0
    %73 = vmatpush.msra.mxu0 0.0
    %74 = vmatpush.msra.mxu0 0.0
    %75 = vmatpush.msra.mxu0 0.0
    %76 = vmatpush.msra.mxu0 0.0
    %77 = vmatpush.msra.mxu0 0.0
    %78 = vmatpush.msra.mxu0 0.0
    %79 = vmatpush.msra.mxu0 0.0
    %80 = vmatpush.msra.mxu0 0.0
    %81 = vmatpush.msra.mxu0 0.0
    %82 = vmatpush.msra.mxu0 0.0
    %83 = vmatpush.msra.mxu0 0.0
    %84 = vmatpush.msra.mxu0 0.0
    %85 = vmatpush.msra.mxu0 0.0
    %86 = vmatpush.msra.mxu0 %v46
    %87 = vmatpush.msra.mxu0 %v44
    %88 = vmatmul.f32.gmra.mxu0 %v67
    %v89 = vpop.f32.mrf.mxu0
    %v90 = vadd.f32 0.0, %v89
    %91 = vmatmul.f32.gmra.mxu0 %v70
    %v92 = vpop.f32.mrf.mxu0
    %v93 = vadd.f32 0.0, %v92
    %94 = vdwg.mxu0
    %95 = vmatpush.msra.mxu0 0.0
    %96 = vmatpush.msra.mxu0 0.0
    %97 = vmatpush.msra.mxu0 0.0
    %98 = vmatpush.msra.mxu0 0.0
    %99 = vmatpush.msra.mxu0 0.0
    %100 = vmatpush.msra.mxu0 0.0
    %101 = vmatpush.msra.mxu0 0.0
    %102 = vmatpush.msra.mxu0 0.0
    %103 = vmatpush.msra.mxu0 0.0
    %104 = vmatpush.msra.mxu0 0.0
    %105 = vmatpush.msra.mxu0 0.0
    %106 = vmatpush.msra.mxu0 0.0
    %107 = vmatpush.msra.mxu0 0.0
    %108 = vmatpush.msra.mxu0 0.0
    %109 = vmatpush.msra.mxu0 %v47
    %110 = vmatpush.msra.mxu0 %v45
    %111 = vmatmul.f32.gmra.mxu0 %v67
    %v112 = vpop.f32.mrf.mxu0
    %v113 = vadd.f32 0.0, %v112
    %114 = vmatmul.f32.gmra.mxu0 %v70
    %v115 = vpop.f32.mrf.mxu0
    %v116 = vadd.f32 0.0, %v115
    %117 = vdwg.mxu0
    %v119 = vperm.slane %v49, 0
    %v120 = vperm.slane %v49, 1
    %v123 = vadd.f32 %v90, %v119
    %v124 = vadd.f32 %v113, %v120
    %v125 = vadd.f32 %v93, %v119
    %v126 = vadd.f32 %v116, %v120
    %v127 = vxor.u32 %v123, 2147483648
    %v128 = vxor.u32 %v125, 2147483648
    %v129 = vmul.f32 %v127, 1.442695
    %v130 = vpow.pop %v129
    %v131 = vmul.f32 %v128, 1.442695
    %v132 = vpow.pop %v131
    %v133 = vadd.f32 %v130, 1.0
    %v134 = vadd.f32 %v132, 1.0
    %v135 = vrcp.pop %v133
    %v136 = vmul.f32 %v133, %v135
    %v137 = vsub.f32 1.0, %v136
    %v138 = vmul.f32 %v135, %v137
    %v139 = vadd.f32 %v135, %v138
    %vm140 = vweird.f32 %v133
    %vm141 = vweird.f32 %v135
    %vm142 = vmor %vm140, %vm141
    %v143 = vsel %vm142, %v135, %v139
    %v144 = vand.u32 2147483647, %v133
    %vm145 = vcmp.eq.f32.partialorder %v144, 8.507059e+37
    %v146 = vand.u32 %v133, 2147483648
    %v147 = vor.u32 1.1754944e-38, %v146
    %v148 = vsel %vm145, %v147, %v143
    %v149 = vmul.f32 1.0, %v148
    %v150 = vrcp.pop %v134
    %v151 = vmul.f32 %v134, %v150
    %v152 = vsub.f32 1.0, %v151
    %v153 = vmul.f32 %v150, %v152
    %v154 = vadd.f32 %v150, %v153
    %vm155 = vweird.f32 %v134
    %vm156 = vweird.f32 %v150
    %vm157 = vmor %vm155, %vm156
    %v158 = vsel %vm157, %v150, %v154
    %v159 = vand.u32 2147483647, %v134
    %vm160 = vcmp.eq.f32.partialorder %v159, 8.507059e+37
    %v161 = vand.u32 %v134, 2147483648
    %v162 = vor.u32 1.1754944e-38, %v161
    %v163 = vsel %vm160, %v162, %v158
    %v164 = vmul.f32 1.0, %v163
    %v165 = vmul.f32 %v149, 2.0
    %v166 = vmul.f32 %v164, 2.0
    %v167 = vsub.f32 %v165, 1.0
    %v168 = vsub.f32 %v166, 1.0
    %171 = vrot.lane.b32.xlu0 %v167, 32
    %v172 = vpop.permute.xlu0 %171
    %173 = vrot.lane.b32.xlu0 %v168, 32
    %v174 = vpop.permute.xlu0 %173
    %v177 = vmul.f32 %v149, %v172
    %v178 = vmul.f32 %v164, %v174
    %v179 = vtanh.pop %v177
    %v180 = vtanh.pop %v178
    %183 = vrot.lane.b32.xlu0 %v179, 64
    %v184 = vpop.permute.xlu0 %183
    %185 = vrot.lane.b32.xlu0 %v180, 64
    %v186 = vpop.permute.xlu0 %185
    %v189 = vmul.f32 %v149, %v184
    %v190 = vmul.f32 %v164, %v186
    %v193 = vrot.slane %v190, 7
    %vm194 = vcmask 1041409
    %v195 = vsel %vm194, %v193, %v189
    %196 = vrot.lane.b32.xlu0 %v195, 64
    %v197 = vpop.permute.xlu0 %196
    %vm198 = vcmask 261120
    %v199 = vsel %vm198, %v197, 0
    %201 = vmatpush.msra.mxu0 0.0
    %202 = vmatpush.msra.mxu0 0.0
    %203 = vmatpush.msra.mxu0 0.0
    %204 = vmatpush.msra.mxu0 0.0
    %205 = vmatpush.msra.mxu0 0.0
    %206 = vmatpush.msra.mxu0 0.0
    %207 = vmatpush.msra.mxu0 0.0
    %208 = vmatpush.msra.mxu0 0.0
    %209 = vmatpush.msra.mxu0 0.0
    %210 = vmatpush.msra.mxu0 0.0
    %211 = vmatpush.msra.mxu0 0.0
    %212 = vmatpush.msra.mxu0 0.0
    %213 = vmatpush.msra.mxu0 %v53
    %214 = vmatpush.msra.mxu0 %v52
    %215 = vmatpush.msra.mxu0 %v51
    %216 = vmatpush.msra.mxu0 %v50
    %217 = vmatmul.f32.gmra.mxu0 %v199
    %v218 = vpop.f32.mrf.mxu0
    %v219 = vadd.f32 0.0, %v218
    %220 = vdwg.mxu0
    %v222 = vrot.slane %v219, 7
    %v225 = vadd.f32 %v123, %v222
    %v226 = vadd.f32 %v125, %v219
    %v227 = vxor.u32 %v225, 2147483648
    %v228 = vxor.u32 %v226, 2147483648
    %v229 = vmul.f32 %v227, 1.442695
    %v230 = vpow.pop %v229
    %v231 = vmul.f32 %v228, 1.442695
    %v232 = vpow.pop %v231
    %v233 = vadd.f32 %v230, 1.0
    %v234 = vadd.f32 %v232, 1.0
    %v235 = vrcp.pop %v233
    %v236 = vmul.f32 %v233, %v235
    %v237 = vsub.f32 1.0, %v236
    %v238 = vmul.f32 %v235, %v237
    %v239 = vadd.f32 %v235, %v238
    %vm240 = vweird.f32 %v233
    %vm241 = vweird.f32 %v235
    %vm242 = vmor %vm240, %vm241
    %v243 = vsel %vm242, %v235, %v239
    %v244 = vand.u32 2147483647, %v233
    %vm245 = vcmp.eq.f32.partialorder %v244, 8.507059e+37
    %v246 = vand.u32 %v233, 2147483648
    %v247 = vor.u32 1.1754944e-38, %v246
    %v248 = vsel %vm245, %v247, %v243
    %v249 = vmul.f32 1.0, %v248
    %v250 = vrcp.pop %v234
    %v251 = vmul.f32 %v234, %v250
    %v252 = vsub.f32 1.0, %v251
    %v253 = vmul.f32 %v250, %v252
    %v254 = vadd.f32 %v250, %v253
    %vm255 = vweird.f32 %v234
    %vm256 = vweird.f32 %v250
    %vm257 = vmor %vm255, %vm256
    %v258 = vsel %vm257, %v250, %v254
    %v259 = vand.u32 2147483647, %v234
    %vm260 = vcmp.eq.f32.partialorder %v259, 8.507059e+37
    %v261 = vand.u32 %v234, 2147483648
    %v262 = vor.u32 1.1754944e-38, %v261
    %v263 = vsel %vm260, %v262, %v258
    %v264 = vmul.f32 1.0, %v263
    %v265 = vmul.f32 %v249, 2.0
    %v266 = vmul.f32 %v264, 2.0
    %v267 = vsub.f32 %v265, 1.0
    %v268 = vsub.f32 %v266, 1.0
    %v271 = vrot.slane %v177, 7
    %v272 = vrot.slane %v178, 7
    %273 = vrot.lane.b32.xlu0 %v271, 32
    %v274 = vpop.permute.xlu0 %273
    %275 = vrot.lane.b32.xlu0 %v272, 32
    %v276 = vpop.permute.xlu0 %275
    %v279 = vmul.f32 %v249, %v274
    %v280 = vmul.f32 %v264, %v276
    %283 = vrot.lane.b32.xlu0 %v267, 32
    %v284 = vpop.permute.xlu0 %283
    %285 = vrot.lane.b32.xlu0 %v268, 32
    %v286 = vpop.permute.xlu0 %285
    %v289 = vmul.f32 %v249, %v284
    %v290 = vmul.f32 %v264, %v286
    %293 = vrot.lane.b32.xlu0 %v289, 32
    %v294 = vpop.permute.xlu0 %293
    %295 = vrot.lane.b32.xlu0 %v290, 32
    %v296 = vpop.permute.xlu0 %295
    %v299 = vadd.f32 %v279, %v294
    %v300 = vadd.f32 %v280, %v296
    %v301 = vtanh.pop %v299
    %v302 = vtanh.pop %v300
    %305 = vrot.lane.b32.xlu0 %v301, 32
    %v306 = vpop.permute.xlu0 %305
    %307 = vrot.lane.b32.xlu0 %v302, 32
    %v308 = vpop.permute.xlu0 %307
    %v311 = vmul.f32 %v249, %v306
    %v312 = vmul.f32 %v264, %v308
    %v315 = vrot.slane %v311, 1
    %v316 = vsel %vm194, %v312, %v315
    %317 = vrot.lane.b32.xlu0 %v316, 64
    %v318 = vpop.permute.xlu0 %317
    %v319 = vsel %vm198, %v318, 0
    %321 = vmatpush.msra.mxu0 0.0
    %322 = vmatpush.msra.mxu0 0.0
    %323 = vmatpush.msra.mxu0 0.0
    %324 = vmatpush.msra.mxu0 0.0
    %325 = vmatpush.msra.mxu0 0.0
    %326 = vmatpush.msra.mxu0 0.0
    %327 = vmatpush.msra.mxu0 0.0
    %328 = vmatpush.msra.mxu0 0.0
    %329 = vmatpush.msra.mxu0 0.0
    %330 = vmatpush.msra.mxu0 0.0
    %331 = vmatpush.msra.mxu0 0.0
    %332 = vmatpush.msra.mxu0 0.0
    %333 = vmatpush.msra.mxu0 %v53
    %334 = vmatpush.msra.mxu0 %v52
    %335 = vmatpush.msra.mxu0 %v51
    %336 = vmatpush.msra.mxu0 %v50
    %337 = vmatmul.f32.gmra.mxu0 %v319
    %v338 = vpop.f32.mrf.mxu0
    %v339 = vadd.f32 0.0, %v338
    %340 = vdwg.mxu0
    %v342 = vrot.slane %v339, 6
    %v343 = vrot.slane %v339, 7
    %v346 = vadd.f32 %v123, %v342
    %v347 = vadd.f32 %v125, %v343
    %v348 = vxor.u32 %v346, 2147483648
    %v349 = vxor.u32 %v347, 2147483648
    %v350 = vmul.f32 %v348, 1.442695
    %v351 = vpow.pop %v350
    %v352 = vmul.f32 %v349, 1.442695
    %v353 = vpow.pop %v352
    %v354 = vadd.f32 %v351, 1.0
    %v355 = vadd.f32 %v353, 1.0
    %v356 = vrcp.pop %v354
    %v357 = vmul.f32 %v354, %v356
    %v358 = vsub.f32 1.0, %v357
    %v359 = vmul.f32 %v356, %v358
    %v360 = vadd.f32 %v356, %v359
    %vm361 = vweird.f32 %v354
    %vm362 = vweird.f32 %v356
    %vm363 = vmor %vm361, %vm362
    %v364 = vsel %vm363, %v356, %v360
    %v365 = vand.u32 2147483647, %v354
    %vm366 = vcmp.eq.f32.partialorder %v365, 8.507059e+37
    %v367 = vand.u32 %v354, 2147483648
    %v368 = vor.u32 1.1754944e-38, %v367
    %v369 = vsel %vm366, %v368, %v364
    %v370 = vmul.f32 1.0, %v369
    %v371 = vrcp.pop %v355
    %v372 = vmul.f32 %v355, %v371
    %v373 = vsub.f32 1.0, %v372
    %v374 = vmul.f32 %v371, %v373
    %v375 = vadd.f32 %v371, %v374
    %vm376 = vweird.f32 %v355
    %vm377 = vweird.f32 %v371
    %vm378 = vmor %vm376, %vm377
    %v379 = vsel %vm378, %v371, %v375
    %v380 = vand.u32 2147483647, %v355
    %vm381 = vcmp.eq.f32.partialorder %v380, 8.507059e+37
    %v382 = vand.u32 %v355, 2147483648
    %v383 = vor.u32 1.1754944e-38, %v382
    %v384 = vsel %vm381, %v383, %v379
    %v385 = vmul.f32 1.0, %v384
    %v386 = vmul.f32 %v370, 2.0
    %v387 = vmul.f32 %v385, 2.0
    %v388 = vsub.f32 %v386, 1.0
    %v389 = vsub.f32 %v387, 1.0
    %v392 = vrot.slane %v299, 7
    %v393 = vrot.slane %v300, 7
    %v396 = vmul.f32 %v370, %v392
    %v397 = vmul.f32 %v385, %v393
    %400 = vrot.lane.b32.xlu0 %v388, 32
    %v401 = vpop.permute.xlu0 %400
    %402 = vrot.lane.b32.xlu0 %v389, 32
    %v403 = vpop.permute.xlu0 %402
    %v406 = vmul.f32 %v370, %v401
    %v407 = vmul.f32 %v385, %v403
    %410 = vrot.lane.b32.xlu0 %v406, 32
    %v411 = vpop.permute.xlu0 %410
    %412 = vrot.lane.b32.xlu0 %v407, 32
    %v413 = vpop.permute.xlu0 %412
    %v416 = vadd.f32 %v396, %v411
    %v417 = vadd.f32 %v397, %v413
    %v418 = vtanh.pop %v416
    %v419 = vtanh.pop %v417
    %422 = vrot.lane.b32.xlu0 %v418, 32
    %v423 = vpop.permute.xlu0 %422
    %424 = vrot.lane.b32.xlu0 %v419, 32
    %v425 = vpop.permute.xlu0 %424
    %v428 = vmul.f32 %v370, %v423
    %v429 = vmul.f32 %v385, %v425
    %v432 = vrot.slane %v428, 2
    %v433 = vrot.slane %v429, 1
    %v434 = vsel %vm194, %v433, %v432
    %435 = vrot.lane.b32.xlu0 %v434, 64
    %v436 = vpop.permute.xlu0 %435
    %v437 = vsel %vm198, %v436, 0
    %439 = vmatpush.msra.mxu0 0.0
    %440 = vmatpush.msra.mxu0 0.0
    %441 = vmatpush.msra.mxu0 0.0
    %442 = vmatpush.msra.mxu0 0.0
    %443 = vmatpush.msra.mxu0 0.0
    %444 = vmatpush.msra.mxu0 0.0
    %445 = vmatpush.msra.mxu0 0.0
    %446 = vmatpush.msra.mxu0 0.0
    %447 = vmatpush.msra.mxu0 0.0
    %448 = vmatpush.msra.mxu0 0.0
    %449 = vmatpush.msra.mxu0 0.0
    %450 = vmatpush.msra.mxu0 0.0
    %451 = vmatpush.msra.mxu0 %v53
    %452 = vmatpush.msra.mxu0 %v52
    %453 = vmatpush.msra.mxu0 %v51
    %454 = vmatpush.msra.mxu0 %v50
    %455 = vmatmul.f32.gmra.mxu0 %v437
    %v456 = vpop.f32.mrf.mxu0
    %v457 = vadd.f32 0.0, %v456
    %458 = vdwg.mxu0
    %v460 = vrot.slane %v457, 5
    %v461 = vrot.slane %v457, 6
    %v464 = vadd.f32 %v123, %v460
    %v465 = vadd.f32 %v125, %v461
    %v466 = vxor.u32 %v464, 2147483648
    %v467 = vxor.u32 %v465, 2147483648
    %v468 = vmul.f32 %v466, 1.442695
    %v469 = vpow.pop %v468
    %v470 = vmul.f32 %v467, 1.442695
    %v471 = vpow.pop %v470
    %v472 = vadd.f32 %v469, 1.0
    %v473 = vadd.f32 %v471, 1.0
    %v474 = vrcp.pop %v472
    %v475 = vmul.f32 %v472, %v474
    %v476 = vsub.f32 1.0, %v475
    %v477 = vmul.f32 %v474, %v476
    %v478 = vadd.f32 %v474, %v477
    %vm479 = vweird.f32 %v472
    %vm480 = vweird.f32 %v474
    %vm481 = vmor %vm479, %vm480
    %v482 = vsel %vm481, %v474, %v478
    %v483 = vand.u32 2147483647, %v472
    %vm484 = vcmp.eq.f32.partialorder %v483, 8.507059e+37
    %v485 = vand.u32 %v472, 2147483648
    %v486 = vor.u32 1.1754944e-38, %v485
    %v487 = vsel %vm484, %v486, %v482
    %v488 = vmul.f32 1.0, %v487
    %v489 = vrcp.pop %v473
    %v490 = vmul.f32 %v473, %v489
    %v491 = vsub.f32 1.0, %v490
    %v492 = vmul.f32 %v489, %v491
    %v493 = vadd.f32 %v489, %v492
    %vm494 = vweird.f32 %v473
    %vm495 = vweird.f32 %v489
    %vm496 = vmor %vm494, %vm495
    %v497 = vsel %vm496, %v489, %v493
    %v498 = vand.u32 2147483647, %v473
    %vm499 = vcmp.eq.f32.partialorder %v498, 8.507059e+37
    %v500 = vand.u32 %v473, 2147483648
    %v501 = vor.u32 1.1754944e-38, %v500
    %v502 = vsel %vm499, %v501, %v497
    %v503 = vmul.f32 1.0, %v502
    %v504 = vmul.f32 %v488, 2.0
    %v505 = vmul.f32 %v503, 2.0
    %v506 = vsub.f32 %v504, 1.0
    %v507 = vsub.f32 %v505, 1.0
    %v510 = vrot.slane %v416, 7
    %v511 = vrot.slane %v417, 7
    %v514 = vmul.f32 %v488, %v510
    %v515 = vmul.f32 %v503, %v511
    %518 = vrot.lane.b32.xlu0 %v506, 32
    %v519 = vpop.permute.xlu0 %518
    %520 = vrot.lane.b32.xlu0 %v507, 32
    %v521 = vpop.permute.xlu0 %520
    %v524 = vmul.f32 %v488, %v519
    %v525 = vmul.f32 %v503, %v521
    %528 = vrot.lane.b32.xlu0 %v524, 32
    %v529 = vpop.permute.xlu0 %528
    %530 = vrot.lane.b32.xlu0 %v525, 32
    %v531 = vpop.permute.xlu0 %530
    %v534 = vadd.f32 %v514, %v529
    %v535 = vadd.f32 %v515, %v531
    %v536 = vtanh.pop %v534
    %v537 = vtanh.pop %v535
    %540 = vrot.lane.b32.xlu0 %v536, 32
    %v541 = vpop.permute.xlu0 %540
    %542 = vrot.lane.b32.xlu0 %v537, 32
    %v543 = vpop.permute.xlu0 %542
    %v546 = vmul.f32 %v488, %v541
    %v547 = vmul.f32 %v503, %v543
    %v550 = vrot.slane %v546, 3
    %v551 = vrot.slane %v547, 2
    %v552 = vsel %vm194, %v551, %v550
    %553 = vrot.lane.b32.xlu0 %v552, 64
    %v554 = vpop.permute.xlu0 %553
    %v555 = vsel %vm198, %v554, 0
    %557 = vmatpush.msra.mxu0 0.0
    %558 = vmatpush.msra.mxu0 0.0
    %559 = vmatpush.msra.mxu0 0.0
    %560 = vmatpush.msra.mxu0 0.0
    %561 = vmatpush.msra.mxu0 0.0
    %562 = vmatpush.msra.mxu0 0.0
    %563 = vmatpush.msra.mxu0 0.0
    %564 = vmatpush.msra.mxu0 0.0
    %565 = vmatpush.msra.mxu0 0.0
    %566 = vmatpush.msra.mxu0 0.0
    %567 = vmatpush.msra.mxu0 0.0
    %568 = vmatpush.msra.mxu0 0.0
    %569 = vmatpush.msra.mxu0 %v53
    %570 = vmatpush.msra.mxu0 %v52
    %571 = vmatpush.msra.mxu0 %v51
    %572 = vmatpush.msra.mxu0 %v50
    %573 = vmatmul.f32.gmra.mxu0 %v555
    %v574 = vpop.f32.mrf.mxu0
    %v575 = vadd.f32 0.0, %v574
    %576 = vdwg.mxu0
    %v578 = vrot.slane %v575, 4
    %v579 = vrot.slane %v575, 5
    %v582 = vadd.f32 %v123, %v578
    %v583 = vadd.f32 %v125, %v579
    %v584 = vxor.u32 %v582, 2147483648
    %v585 = vxor.u32 %v583, 2147483648
    %v586 = vmul.f32 %v584, 1.442695
    %v587 = vpow.pop %v586
    %v588 = vmul.f32 %v585, 1.442695
    %v589 = vpow.pop %v588
    %v590 = vadd.f32 %v587, 1.0
    %v591 = vadd.f32 %v589, 1.0
    %v592 = vrcp.pop %v590
    %v593 = vmul.f32 %v590, %v592
    %v594 = vsub.f32 1.0, %v593
    %v595 = vmul.f32 %v592, %v594
    %v596 = vadd.f32 %v592, %v595
    %vm597 = vweird.f32 %v590
    %vm598 = vweird.f32 %v592
    %vm599 = vmor %vm597, %vm598
    %v600 = vsel %vm599, %v592, %v596
    %v601 = vand.u32 2147483647, %v590
    %vm602 = vcmp.eq.f32.partialorder %v601, 8.507059e+37
    %v603 = vand.u32 %v590, 2147483648
    %v604 = vor.u32 1.1754944e-38, %v603
    %v605 = vsel %vm602, %v604, %v600
    %v606 = vmul.f32 1.0, %v605
    %v607 = vrcp.pop %v591
    %v608 = vmul.f32 %v591, %v607
    %v609 = vsub.f32 1.0, %v608
    %v610 = vmul.f32 %v607, %v609
    %v611 = vadd.f32 %v607, %v610
    %vm612 = vweird.f32 %v591
    %vm613 = vweird.f32 %v607
    %vm614 = vmor %vm612, %vm613
    %v615 = vsel %vm614, %v607, %v611
    %v616 = vand.u32 2147483647, %v591
    %vm617 = vcmp.eq.f32.partialorder %v616, 8.507059e+37
    %v618 = vand.u32 %v591, 2147483648
    %v619 = vor.u32 1.1754944e-38, %v618
    %v620 = vsel %vm617, %v619, %v615
    %v621 = vmul.f32 1.0, %v620
    %v622 = vmul.f32 %v606, 2.0
    %v623 = vmul.f32 %v621, 2.0
    %v624 = vsub.f32 %v622, 1.0
    %v625 = vsub.f32 %v623, 1.0
    %v628 = vrot.slane %v534, 7
    %v629 = vrot.slane %v535, 7
    %v632 = vmul.f32 %v606, %v628
    %v633 = vmul.f32 %v621, %v629
    %636 = vrot.lane.b32.xlu0 %v624, 32
    %v637 = vpop.permute.xlu0 %636
    %638 = vrot.lane.b32.xlu0 %v625, 32
    %v639 = vpop.permute.xlu0 %638
    %v642 = vmul.f32 %v606, %v637
    %v643 = vmul.f32 %v621, %v639
    %646 = vrot.lane.b32.xlu0 %v642, 32
    %v647 = vpop.permute.xlu0 %646
    %648 = vrot.lane.b32.xlu0 %v643, 32
    %v649 = vpop.permute.xlu0 %648
    %v652 = vadd.f32 %v632, %v647
    %v653 = vadd.f32 %v633, %v649
    %v654 = vtanh.pop %v652
    %v655 = vtanh.pop %v653
    %658 = vrot.lane.b32.xlu0 %v654, 32
    %v659 = vpop.permute.xlu0 %658
    %660 = vrot.lane.b32.xlu0 %v655, 32
    %v661 = vpop.permute.xlu0 %660
    %v664 = vmul.f32 %v606, %v659
    %v665 = vmul.f32 %v621, %v661
    %v668 = vrot.slane %v664, 4
    %v669 = vrot.slane %v665, 3
    %v670 = vsel %vm194, %v669, %v668
    %671 = vrot.lane.b32.xlu0 %v670, 64
    %v672 = vpop.permute.xlu0 %671
    %v673 = vsel %vm198, %v672, 0
    %675 = vmatpush.msra.mxu0 0.0
    %676 = vmatpush.msra.mxu0 0.0
    %677 = vmatpush.msra.mxu0 0.0
    %678 = vmatpush.msra.mxu0 0.0
    %679 = vmatpush.msra.mxu0 0.0
    %680 = vmatpush.msra.mxu0 0.0
    %681 = vmatpush.msra.mxu0 0.0
    %682 = vmatpush.msra.mxu0 0.0
    %683 = vmatpush.msra.mxu0 0.0
    %684 = vmatpush.msra.mxu0 0.0
    %685 = vmatpush.msra.mxu0 0.0
    %686 = vmatpush.msra.mxu0 0.0
    %687 = vmatpush.msra.mxu0 %v53
    %688 = vmatpush.msra.mxu0 %v52
    %689 = vmatpush.msra.mxu0 %v51
    %690 = vmatpush.msra.mxu0 %v50
    %691 = vmatmul.f32.gmra.mxu0 %v673
    %v692 = vpop.f32.mrf.mxu0
    %v693 = vadd.f32 0.0, %v692
    %694 = vdwg.mxu0
    %v696 = vrot.slane %v693, 3
    %v697 = vrot.slane %v693, 4
    %v700 = vadd.f32 %v123, %v696
    %v701 = vadd.f32 %v125, %v697
    %v702 = vxor.u32 %v700, 2147483648
    %v703 = vxor.u32 %v701, 2147483648
    %v704 = vmul.f32 %v702, 1.442695
    %v705 = vpow.pop %v704
    %v706 = vmul.f32 %v703, 1.442695
    %v707 = vpow.pop %v706
    %v708 = vadd.f32 %v705, 1.0
    %v709 = vadd.f32 %v707, 1.0
    %v710 = vrcp.pop %v708
    %v711 = vmul.f32 %v708, %v710
    %v712 = vsub.f32 1.0, %v711
    %v713 = vmul.f32 %v710, %v712
    %v714 = vadd.f32 %v710, %v713
    %vm715 = vweird.f32 %v708
    %vm716 = vweird.f32 %v710
    %vm717 = vmor %vm715, %vm716
    %v718 = vsel %vm717, %v710, %v714
    %v719 = vand.u32 2147483647, %v708
    %vm720 = vcmp.eq.f32.partialorder %v719, 8.507059e+37
    %v721 = vand.u32 %v708, 2147483648
    %v722 = vor.u32 1.1754944e-38, %v721
    %v723 = vsel %vm720, %v722, %v718
    %v724 = vmul.f32 1.0, %v723
    %v725 = vrcp.pop %v709
    %v726 = vmul.f32 %v709, %v725
    %v727 = vsub.f32 1.0, %v726
    %v728 = vmul.f32 %v725, %v727
    %v729 = vadd.f32 %v725, %v728
    %vm730 = vweird.f32 %v709
    %vm731 = vweird.f32 %v725
    %vm732 = vmor %vm730, %vm731
    %v733 = vsel %vm732, %v725, %v729
    %v734 = vand.u32 2147483647, %v709
    %vm735 = vcmp.eq.f32.partialorder %v734, 8.507059e+37
    %v736 = vand.u32 %v709, 2147483648
    %v737 = vor.u32 1.1754944e-38, %v736
    %v738 = vsel %vm735, %v737, %v733
    %v739 = vmul.f32 1.0, %v738
    %v740 = vmul.f32 %v724, 2.0
    %v741 = vmul.f32 %v739, 2.0
    %v742 = vsub.f32 %v740, 1.0
    %v743 = vsub.f32 %v741, 1.0
    %v746 = vrot.slane %v652, 7
    %v747 = vrot.slane %v653, 7
    %v750 = vmul.f32 %v724, %v746
    %v751 = vmul.f32 %v739, %v747
    %754 = vrot.lane.b32.xlu0 %v742, 32
    %v755 = vpop.permute.xlu0 %754
    %756 = vrot.lane.b32.xlu0 %v743, 32
    %v757 = vpop.permute.xlu0 %756
    %v760 = vmul.f32 %v724, %v755
    %v761 = vmul.f32 %v739, %v757
    %764 = vrot.lane.b32.xlu0 %v760, 32
    %v765 = vpop.permute.xlu0 %764
    %766 = vrot.lane.b32.xlu0 %v761, 32
    %v767 = vpop.permute.xlu0 %766
    %v770 = vadd.f32 %v750, %v765
    %v771 = vadd.f32 %v751, %v767
    %v772 = vtanh.pop %v770
    %v773 = vtanh.pop %v771
    %776 = vrot.lane.b32.xlu0 %v772, 32
    %v777 = vpop.permute.xlu0 %776
    %778 = vrot.lane.b32.xlu0 %v773, 32
    %v779 = vpop.permute.xlu0 %778
    %v782 = vmul.f32 %v724, %v777
    %v783 = vmul.f32 %v739, %v779
    %v786 = vrot.slane %v782, 5
    %v787 = vrot.slane %v783, 4
    %v788 = vsel %vm194, %v787, %v786
    %789 = vrot.lane.b32.xlu0 %v788, 64
    %v790 = vpop.permute.xlu0 %789
    %v791 = vsel %vm198, %v790, 0
    %793 = vmatpush.msra.mxu0 0.0
    %794 = vmatpush.msra.mxu0 0.0
    %795 = vmatpush.msra.mxu0 0.0
    %796 = vmatpush.msra.mxu0 0.0
    %797 = vmatpush.msra.mxu0 0.0
    %798 = vmatpush.msra.mxu0 0.0
    %799 = vmatpush.msra.mxu0 0.0
    %800 = vmatpush.msra.mxu0 0.0
    %801 = vmatpush.msra.mxu0 0.0
    %802 = vmatpush.msra.mxu0 0.0
    %803 = vmatpush.msra.mxu0 0.0
    %804 = vmatpush.msra.mxu0 0.0
    %805 = vmatpush.msra.mxu0 %v53
    %806 = vmatpush.msra.mxu0 %v52
    %807 = vmatpush.msra.mxu0 %v51
    %808 = vmatpush.msra.mxu0 %v50
    %809 = vmatmul.f32.gmra.mxu0 %v791
    %v810 = vpop.f32.mrf.mxu0
    %v811 = vadd.f32 0.0, %v810
    %812 = vdwg.mxu0
    %v814 = vrot.slane %v811, 2
    %v815 = vrot.slane %v811, 3
    %v818 = vadd.f32 %v123, %v814
    %v819 = vadd.f32 %v125, %v815
    %v820 = vxor.u32 %v818, 2147483648
    %v821 = vxor.u32 %v819, 2147483648
    %v822 = vmul.f32 %v820, 1.442695
    %v823 = vpow.pop %v822
    %v824 = vmul.f32 %v821, 1.442695
    %v825 = vpow.pop %v824
    %v826 = vadd.f32 %v823, 1.0
    %v827 = vadd.f32 %v825, 1.0
    %v828 = vrcp.pop %v826
    %v829 = vmul.f32 %v826, %v828
    %v830 = vsub.f32 1.0, %v829
    %v831 = vmul.f32 %v828, %v830
    %v832 = vadd.f32 %v828, %v831
    %vm833 = vweird.f32 %v826
    %vm834 = vweird.f32 %v828
    %vm835 = vmor %vm833, %vm834
    %v836 = vsel %vm835, %v828, %v832
    %v837 = vand.u32 2147483647, %v826
    %vm838 = vcmp.eq.f32.partialorder %v837, 8.507059e+37
    %v839 = vand.u32 %v826, 2147483648
    %v840 = vor.u32 1.1754944e-38, %v839
    %v841 = vsel %vm838, %v840, %v836
    %v842 = vmul.f32 1.0, %v841
    %v843 = vrcp.pop %v827
    %v844 = vmul.f32 %v827, %v843
    %v845 = vsub.f32 1.0, %v844
    %v846 = vmul.f32 %v843, %v845
    %v847 = vadd.f32 %v843, %v846
    %vm848 = vweird.f32 %v827
    %vm849 = vweird.f32 %v843
    %vm850 = vmor %vm848, %vm849
    %v851 = vsel %vm850, %v843, %v847
    %v852 = vand.u32 2147483647, %v827
    %vm853 = vcmp.eq.f32.partialorder %v852, 8.507059e+37
    %v854 = vand.u32 %v827, 2147483648
    %v855 = vor.u32 1.1754944e-38, %v854
    %v856 = vsel %vm853, %v855, %v851
    %v857 = vmul.f32 1.0, %v856
    %v858 = vmul.f32 %v842, 2.0
    %v859 = vmul.f32 %v857, 2.0
    %v860 = vsub.f32 %v858, 1.0
    %v861 = vsub.f32 %v859, 1.0
    %v864 = vrot.slane %v770, 7
    %v865 = vrot.slane %v771, 7
    %v868 = vmul.f32 %v842, %v864
    %v869 = vmul.f32 %v857, %v865
    %872 = vrot.lane.b32.xlu0 %v860, 32
    %v873 = vpop.permute.xlu0 %872
    %874 = vrot.lane.b32.xlu0 %v861, 32
    %v875 = vpop.permute.xlu0 %874
    %v878 = vmul.f32 %v842, %v873
    %v879 = vmul.f32 %v857, %v875
    %882 = vrot.lane.b32.xlu0 %v878, 32
    %v883 = vpop.permute.xlu0 %882
    %884 = vrot.lane.b32.xlu0 %v879, 32
    %v885 = vpop.permute.xlu0 %884
    %v888 = vadd.f32 %v868, %v883
    %v889 = vadd.f32 %v869, %v885
    %v890 = vtanh.pop %v888
    %v891 = vtanh.pop %v889
    %894 = vrot.lane.b32.xlu0 %v890, 32
    %v895 = vpop.permute.xlu0 %894
    %896 = vrot.lane.b32.xlu0 %v891, 32
    %v897 = vpop.permute.xlu0 %896
    %v900 = vmul.f32 %v842, %v895
    %v901 = vmul.f32 %v857, %v897
    %v904 = vrot.slane %v900, 6
    %v905 = vrot.slane %v901, 5
    %v906 = vsel %vm194, %v905, %v904
    %907 = vrot.lane.b32.xlu0 %v906, 64
    %v908 = vpop.permute.xlu0 %907
    %v909 = vsel %vm198, %v908, 0
    %911 = vmatpush.msra.mxu0 0.0
    %912 = vmatpush.msra.mxu0 0.0
    %913 = vmatpush.msra.mxu0 0.0
    %914 = vmatpush.msra.mxu0 0.0
    %915 = vmatpush.msra.mxu0 0.0
    %916 = vmatpush.msra.mxu0 0.0
    %917 = vmatpush.msra.mxu0 0.0
    %918 = vmatpush.msra.mxu0 0.0
    %919 = vmatpush.msra.mxu0 0.0
    %920 = vmatpush.msra.mxu0 0.0
    %921 = vmatpush.msra.mxu0 0.0
    %922 = vmatpush.msra.mxu0 0.0
    %923 = vmatpush.msra.mxu0 %v53
    %924 = vmatpush.msra.mxu0 %v52
    %925 = vmatpush.msra.mxu0 %v51
    %926 = vmatpush.msra.mxu0 %v50
    %927 = vmatmul.f32.gmra.mxu0 %v909
    %v928 = vpop.f32.mrf.mxu0
    %v929 = vadd.f32 0.0, %v928
    %930 = vdwg.mxu0
    %v932 = vrot.slane %v929, 1
    %v933 = vrot.slane %v929, 2
    %v936 = vadd.f32 %v123, %v932
    %v937 = vadd.f32 %v125, %v933
    %v938 = vxor.u32 %v936, 2147483648
    %v939 = vxor.u32 %v937, 2147483648
    %v940 = vmul.f32 %v938, 1.442695
    %v941 = vpow.pop %v940
    %v942 = vmul.f32 %v939, 1.442695
    %v943 = vpow.pop %v942
    %v944 = vadd.f32 %v941, 1.0
    %v945 = vadd.f32 %v943, 1.0
    %v946 = vrcp.pop %v944
    %v947 = vmul.f32 %v944, %v946
    %v948 = vsub.f32 1.0, %v947
    %v949 = vmul.f32 %v946, %v948
    %v950 = vadd.f32 %v946, %v949
    %vm951 = vweird.f32 %v944
    %vm952 = vweird.f32 %v946
    %vm953 = vmor %vm951, %vm952
    %v954 = vsel %vm953, %v946, %v950
    %v955 = vand.u32 2147483647, %v944
    %vm956 = vcmp.eq.f32.partialorder %v955, 8.507059e+37
    %v957 = vand.u32 %v944, 2147483648
    %v958 = vor.u32 1.1754944e-38, %v957
    %v959 = vsel %vm956, %v958, %v954
    %v960 = vmul.f32 1.0, %v959
    %v961 = vrcp.pop %v945
    %v962 = vmul.f32 %v945, %v961
    %v963 = vsub.f32 1.0, %v962
    %v964 = vmul.f32 %v961, %v963
    %v965 = vadd.f32 %v961, %v964
    %vm966 = vweird.f32 %v945
    %vm967 = vweird.f32 %v961
    %vm968 = vmor %vm966, %vm967
    %v969 = vsel %vm968, %v961, %v965
    %v970 = vand.u32 2147483647, %v945
    %vm971 = vcmp.eq.f32.partialorder %v970, 8.507059e+37
    %v972 = vand.u32 %v945, 2147483648
    %v973 = vor.u32 1.1754944e-38, %v972
    %v974 = vsel %vm971, %v973, %v969
    %v975 = vmul.f32 1.0, %v974
    %v976 = vmul.f32 %v960, 2.0
    %v977 = vmul.f32 %v975, 2.0
    %v978 = vsub.f32 %v976, 1.0
    %v979 = vsub.f32 %v977, 1.0
    %v982 = vrot.slane %v888, 7
    %v983 = vrot.slane %v889, 7
    %v986 = vmul.f32 %v960, %v982
    %v987 = vmul.f32 %v975, %v983
    %990 = vrot.lane.b32.xlu0 %v978, 32
    %v991 = vpop.permute.xlu0 %990
    %992 = vrot.lane.b32.xlu0 %v979, 32
    %v993 = vpop.permute.xlu0 %992
    %v996 = vmul.f32 %v960, %v991
    %v997 = vmul.f32 %v975, %v993
    %1000 = vrot.lane.b32.xlu0 %v996, 32
    %v1001 = vpop.permute.xlu0 %1000
    %1002 = vrot.lane.b32.xlu0 %v997, 32
    %v1003 = vpop.permute.xlu0 %1002
    %v1006 = vadd.f32 %v986, %v1001
    %v1007 = vadd.f32 %v987, %v1003
    %v1008 = vtanh.pop %v1006
    %v1009 = vtanh.pop %v1007
    %1012 = vrot.lane.b32.xlu0 %v1008, 32
    %v1013 = vpop.permute.xlu0 %1012
    %1014 = vrot.lane.b32.xlu0 %v1009, 32
    %v1015 = vpop.permute.xlu0 %1014
    %v1018 = vmul.f32 %v960, %v1013
    %v1019 = vmul.f32 %v975, %v1015
    %v1020 = vxor.u32 %v124, 2147483648
    %v1021 = vxor.u32 %v126, 2147483648
    %v1022 = vmul.f32 %v1020, 1.442695
    %v1023 = vpow.pop %v1022
    %v1024 = vmul.f32 %v1021, 1.442695
    %v1025 = vpow.pop %v1024
    %v1026 = vadd.f32 %v1023, 1.0
    %v1027 = vadd.f32 %v1025, 1.0
    %v1028 = vrcp.pop %v1026
    %v1029 = vmul.f32 %v1026, %v1028
    %v1030 = vsub.f32 1.0, %v1029
    %v1031 = vmul.f32 %v1028, %v1030
    %v1032 = vadd.f32 %v1028, %v1031
    %vm1033 = vweird.f32 %v1026
    %vm1034 = vweird.f32 %v1028
    %vm1035 = vmor %vm1033, %vm1034
    %v1036 = vsel %vm1035, %v1028, %v1032
    %v1037 = vand.u32 2147483647, %v1026
    %vm1038 = vcmp.eq.f32.partialorder %v1037, 8.507059e+37
    %v1039 = vand.u32 %v1026, 2147483648
    %v1040 = vor.u32 1.1754944e-38, %v1039
    %v1041 = vsel %vm1038, %v1040, %v1036
    %v1042 = vmul.f32 1.0, %v1041
    %v1043 = vrcp.pop %v1027
    %v1044 = vmul.f32 %v1027, %v1043
    %v1045 = vsub.f32 1.0, %v1044
    %v1046 = vmul.f32 %v1043, %v1045
    %v1047 = vadd.f32 %v1043, %v1046
    %vm1048 = vweird.f32 %v1027
    %vm1049 = vweird.f32 %v1043
    %vm1050 = vmor %vm1048, %vm1049
    %v1051 = vsel %vm1050, %v1043, %v1047
    %v1052 = vand.u32 2147483647, %v1027
    %vm1053 = vcmp.eq.f32.partialorder %v1052, 8.507059e+37
    %v1054 = vand.u32 %v1027, 2147483648
    %v1055 = vor.u32 1.1754944e-38, %v1054
    %v1056 = vsel %vm1053, %v1055, %v1051
    %v1057 = vmul.f32 1.0, %v1056
    %v1058 = vmul.f32 %v1042, 2.0
    %v1059 = vmul.f32 %v1057, 2.0
    %v1060 = vsub.f32 %v1058, 1.0
    %v1061 = vsub.f32 %v1059, 1.0
    %1064 = vrot.lane.b32.xlu0 %v1060, 32
    %v1065 = vpop.permute.xlu0 %1064
    %1066 = vrot.lane.b32.xlu0 %v1061, 32
    %v1067 = vpop.permute.xlu0 %1066
    %v1070 = vmul.f32 %v1042, %v1065
    %v1071 = vmul.f32 %v1057, %v1067
    %v1072 = vtanh.pop %v1070
    %v1073 = vtanh.pop %v1071
    %1076 = vrot.lane.b32.xlu0 %v1072, 64
    %v1077 = vpop.permute.xlu0 %1076
    %1078 = vrot.lane.b32.xlu0 %v1073, 64
    %v1079 = vpop.permute.xlu0 %1078
    %v1082 = vmul.f32 %v1042, %v1077
    %v1083 = vmul.f32 %v1057, %v1079
    %v1086 = vrot.slane %v1019, 7
    %1087 = vrot.lane.b32.xlu0 %v1018, 64
    %v1088 = vpop.permute.xlu0 %1087
    %1089 = vrot.lane.b32.xlu0 %v1086, 64
    %v1090 = vpop.permute.xlu0 %1089
    %v1095 = vrot.slane %v1083, 7
    %1096 = vrot.lane.b32.xlu0 %v1082, 96
    %v1097 = vpop.permute.xlu0 %1096
    %1098 = vrot.lane.b32.xlu0 %v1095, 96
    %v1099 = vpop.permute.xlu0 %1098
    %v1102 = vsel %vm198, %v1088, %v1097
    %v1103 = vsel %vm198, %v1090, %v1099
    %vm1106 = vcmask 1040384
    %v1107 = vrot.slane %v1102, 7
    %v1108 = vrot.slane %v1103, 7
    %v1109 = vsel %vm1106, %v1107, %v1108
    %vm1110 = vcmask 523264
    %v1111 = vsel %vm1110, %v1109, 0
    %1113 = vmatpush.msra.mxu0 0.0
    %1114 = vmatpush.msra.mxu0 0.0
    %1115 = vmatpush.msra.mxu0 0.0
    %1116 = vmatpush.msra.mxu0 0.0
    %1117 = vmatpush.msra.mxu0 0.0
    %1118 = vmatpush.msra.mxu0 0.0
    %1119 = vmatpush.msra.mxu0 0.0
    %1120 = vmatpush.msra.mxu0 0.0
    %1121 = vmatpush.msra.mxu0 %v61
    %1122 = vmatpush.msra.mxu0 %v60
    %1123 = vmatpush.msra.mxu0 %v59
    %1124 = vmatpush.msra.mxu0 %v58
    %1125 = vmatpush.msra.mxu0 %v57
    %1126 = vmatpush.msra.mxu0 %v56
    %1127 = vmatpush.msra.mxu0 %v55
    %1128 = vmatpush.msra.mxu0 %v54
    %1129 = vmatmul.f32.gmra.mxu0 %v1111
    %v1130 = vpop.f32.mrf.mxu0
    %v1131 = vadd.f32 %v62, %v1130
    %1132 = vdwg.mxu0
    %vm1133 = vcmask 25600
    %1134 = vst.msk [vmem:[#allocation7] sm:$0x3] %vm1133, %v1131
    // Predicated region
    $region18: #{forward.1} parent=1 // pred_check
      _
    $region19: #{forward.1} parent=1 // pred_check_branch
      %1136 = sbr.rel (0) target = $region21
    $region20: #{forward.1} parent=1 // pred_region
      %1138 = vsyncadd [#allocation4], 0
      %s1140 = sshll.u32 [#allocation7], 4
      %s1141 = int_to_ptr.vmem [resolvable:$true] %s1140
      %s1142 = sshll.u32 %s2, 4
      %s1143 = int_to_ptr.hbm [resolvable:$true] %s1142
      %1145 = dma.vmem_to_hbm [thread:$0]  %s1141, 32, %s1143, [#allocation4]
    $region21: #{forward.1} parent=1 // pred_fallthru
      _
    // Predicated region
    $region22: #{forward.1} parent=1 // pred_check
      _
    $region23: #{forward.1} parent=1 // pred_check_branch
      %1147 = sbr.rel (0) target = $region25
    $region24: #{forward.1} parent=1 // pred_region
      %1149 = dma.done [#allocation4], 32
    $region25: #{forward.1} parent=1 // pred_fallthru
      _
    %1150 = vsyncpa [#allocation3], 1
    %1151 = vsyncpa [#allocation6], 1
    %1152 = vsyncpa [#allocation4], 1

</llo_original>
